<compile_context>
chip_gen: v5e
topology: v5e:2x2
jax: 0.10.0
libtpu: 0.0.40
codegen_flags: <defaults>
</compile_context>

<pallas_src>
import jax
import jax.numpy as jnp
import numpy as np
from jax import lax
from jax.experimental import pallas as pl
from jax.experimental.pallas import tpu as pltpu


def _round_up(n, m):
    return ((n + m - 1) // m) * m


def _vmem_capacity_bytes():
    """Physical VMEM of the attached TPU; conservative 64 MiB (v7x) fallback."""
    try:
        info = pltpu.get_tpu_info()
        cap = getattr(info, "vmem_capacity_bytes", None)
        if cap:
            return int(cap)
    except Exception:
        pass
    return 64 * 1024 * 1024


def _choose_batch_tile(B, Rp, J, L, A, in_itemsize, vmem_budget):
    """Pick the batch tile TB (multiple of 8).

    Targets: ~2 MiB of x streamed per step (amortizes the ~0.35us/step pipeline
    overhead), >=4 grid steps when the batch allows it (per-core pipelining and
    both v7x TCs busy), and a per-step working set within the VMEM budget.
    """
    row_x_bytes = Rp * J * in_itemsize
    tb_bytes = max(8, (2 * 1024 * 1024 // max(row_x_bytes, 1)) // 8 * 8)

    tb_steps = max(8, (B // 4) // 8 * 8)          # aim for >=4 grid steps

    per_row = (2 * Rp * J * in_itemsize           # x tile (double buffered)
               + 2 * L * in_itemsize              # h tile (double buffered)
               + 2 * J * 4                        # f32 output tile (double buffered)
               + 2 * Rp * A * 4                   # img_emb + tanh activations (f32)
               + Rp * J * (in_itemsize + 4)       # weighted product + f32 copy
               + 32 * Rp)                         # logits / softmax small tensors
    const = (J * A + L * A + A) * 4               # resident single-buffered weights
    tb_vmem = max(8, ((vmem_budget - const) // max(per_row, 1)) // 8 * 8)

    return max(8, min(tb_bytes, tb_steps, tb_vmem, _round_up(B, 8)))


def _make_visual_attention_kernel(r_valid):
    def kernel(x_ref, h_ref, wimg_ref, wlang_ref, watt_ref, o_ref):
        # x_ref:     (TB, Rp, J)  batch tile of region features (Rp % 8 == 0)
        # h_ref:     (TB, L)      batch tile of language encodings
        # wimg_ref:  (J, A)       linear_image_features weight, transposed (in, out)
        # wlang_ref: (L, A)       linear_lang_enc weight, transposed (in, out)
        # watt_ref:  (1, A)       linear_attention weight row (f32)
        # o_ref:     (TB, J)      attention-weighted image features (f32)
        TB, Rp, J = x_ref.shape
        A = wimg_ref.shape[1]

        x = x_ref[...]                                         # (TB, Rp, J)
        # Rp is sublane-aligned, so this reshape is a view (no relayout copy).
        x2 = x.reshape(TB * Rp, J)

        # Region embedding: one large MXU matmul per tile (f32 accumulation).
        img_emb = jnp.dot(x2, wimg_ref[...],
                          preferred_element_type=jnp.float32)  # (TB*Rp, A)
        # Language embedding: one matmul for the whole batch tile.
        lang_emb = jnp.dot(h_ref[...], wlang_ref[...],
                           preferred_element_type=jnp.float32)  # (TB, A)

        # tanh(img_emb + lang_emb) with lang_emb broadcast over regions (f32).
        act = jnp.tanh(img_emb.reshape(TB, Rp, A) + lang_emb[:, None, :])

        # Attention logits on the VPU + lane reduction over A. b_att omitted:
        # a constant logit shift cancels under the softmax.
        attn = jnp.sum(act * watt_ref[...], axis=-1)           # (TB, Rp) f32

        if r_valid < Rp:  # static: mask zero-padded regions out of the softmax
            rid = lax.broadcasted_iota(jnp.int32, (TB, Rp), 1)
            attn = jnp.where(rid < r_valid, attn, -1e30)

        # Softmax over regions: dense lane reductions; divide -> EUP reciprocal.
        m = jnp.max(attn, axis=-1, keepdims=True)               # (TB, 1)
        e = jnp.exp(attn - m)                                    # (TB, Rp)
        p = e * pl.reciprocal(jnp.sum(e, axis=-1, keepdims=True), approx=True)

        # Weighted sum over the ORIGINAL features on the VPU/XLU (both have
        # slack in this HBM-bound kernel). Multiply in x's native dtype (no f32
        # copy of the x tile), accumulate the region reduction in f32.
        w = p.astype(x.dtype)[:, :, None]                        # (TB, Rp, 1)
        out = jnp.sum((w * x).astype(jnp.float32), axis=1)       # (TB, J)
        o_ref[...] = out.astype(o_ref.dtype)

    return kernel


def visual_attention(images_embedded, h_lang_enc, w_img, w_lang, w_att, b_att,
                     *, batch_tile=None, input_dtype=jnp.bfloat16):
    """
    images_embedded: (B, R, J)
    h_lang_enc:      (B, L)
    w_img:  (A, J)  PyTorch nn.Linear layout (out_features, in_features), no bias
    w_lang: (A, L)  PyTorch layout, no bias
    w_att:  (1, A), b_att: (1,)
    returns (B, J) float32

    input_dtype defaults to bfloat16 on ALL TPU generations (incl. v5e): the
    kernel is HBM-bound on images_embedded, so halving its bytes is ~2x there;
    matmuls still accumulate in f32 and tanh/softmax stay f32. Pass float32 if
    bit-tight numerics against an f32 reference are required.
    """
    B, R, J = images_embedded.shape
    L = h_lang_enc.shape[1]
    A = w_img.shape[0]

    in_itemsize = jnp.dtype(input_dtype).itemsize
    Rp = _round_up(R, 8)  # keep in-kernel reshapes tile-aligned views

    vmem_cap = _vmem_capacity_bytes()
    vmem_limit = min(int(vmem_cap * 0.85), 100 * 1024 * 1024)

    if batch_tile is None:
        batch_tile = _choose_batch_tile(B, Rp, J, L, A, in_itemsize,
                                        int(vmem_cap * 0.70))
    TB = max(8, _round_up(batch_tile, 8))
    Bp = _round_up(B, TB)

    x = jnp.asarray(images_embedded, input_dtype)
    h = jnp.asarray(h_lang_enc, input_dtype)
    if Rp != R:
        # Zero-padded regions are masked out of the softmax inside the kernel.
        x = jnp.pad(x, ((0, 0), (0, Rp - R), (0, 0)))
    if Bp != B:
        # Zero-padded batch rows produce outputs that are sliced away below.
        x = jnp.pad(x, ((0, Bp - B), (0, 0), (0, 0)))
        h = jnp.pad(h, ((0, Bp - B), (0, 0)))

    # Weights transposed to (in, out) so the kernel computes x @ W directly
    # (same math as PyTorch nn.Linear: out = x @ W.T). Glue only.
    w_img_t = jnp.asarray(w_img, input_dtype).T            # (J, A)
    w_lang_t = jnp.asarray(w_lang, input_dtype).T          # (L, A)
    w_att_row = jnp.asarray(w_att, jnp.float32).reshape(1, A)
    # b_att intentionally unused in-kernel: constant logit shift cancels in softmax.

    resident = pl.Buffered(buffer_count=1)   # constant-index weights: single buffer

    grid_spec = pltpu.PrefetchScalarGridSpec(
        num_scalar_prefetch=0,
        grid=(Bp // TB,),
        in_specs=[
            pl.BlockSpec((TB, Rp, J), lambda b: (b, 0, 0)),            # x tile
            pl.BlockSpec((TB, L), lambda b: (b, 0)),                   # h tile
            pl.BlockSpec((J, A), lambda b: (0, 0), pipeline_mode=resident),
            pl.BlockSpec((L, A), lambda b: (0, 0), pipeline_mode=resident),
            pl.BlockSpec((1, A), lambda b: (0, 0), pipeline_mode=resident),
        ],
        out_specs=pl.BlockSpec((TB, J), lambda b: (b, 0)),
    )

    out = pl.pallas_call(
        _make_visual_attention_kernel(R),
        out_shape=jax.ShapeDtypeStruct((Bp, J), jnp.float32),
        grid_spec=grid_spec,
        compiler_params=pltpu.CompilerParams(
            dimension_semantics=("parallel",),
            vmem_limit_bytes=vmem_limit),
    )(x, h, w_img_t, w_lang_t, w_att_row)

    return out[:B]


def visual_attention_ref(images_embedded, h_lang_enc, w_img, w_lang, w_att, b_att):
    """Pure-JAX reference matching the PyTorch forward."""
    img_emb = jnp.einsum("brj,aj->bra", images_embedded, w_img)
    lang_emb = jnp.einsum("bl,al->ba", h_lang_enc, w_lang)[:, None, :]
    act = jnp.tanh(img_emb + lang_emb)
    attn = jnp.einsum("bra,oa->bro", act, w_att) + b_att           # (B, R, 1)
    p = jax.nn.softmax(attn, axis=1)
    return jnp.sum(p * images_embedded, axis=1)                    # (B, J)


if __name__ == "__main__":
    # Small shapes consistent with the module's forward.
    B, R = 2, 10         # batch, num image regions (deliberately not 8-aligned)
    J = 32               # joint_embeddings_size
    L = 16               # lang_enc_lstm_size
    A = 24               # attention_layer_size

    key = jax.random.PRNGKey(0)
    k1, k2, k3, k4, k5, k6 = jax.random.split(key, 6)

    images_embedded = jax.random.normal(k1, (B, R, J), jnp.float32)
    h_lang_enc = jax.random.normal(k2, (B, L), jnp.float32)

    # Deterministic parameter init (PyTorch nn.Linear weight layout).
    w_img = 0.1 * jax.random.normal(k3, (A, J), jnp.float32)   # linear_image_features (no bias)
    w_lang = 0.1 * jax.random.normal(k4, (A, L), jnp.float32)  # linear_lang_enc (no bias)
    w_att = 0.1 * jax.random.normal(k5, (1, A), jnp.float32)   # linear_attention weight
    b_att = 0.1 * jax.random.normal(k6, (1,), jnp.float32)     # linear_attention bias

    ref = visual_attention_ref(images_embedded, h_lang_enc, w_img, w_lang, w_att, b_att)

    # f32 input path: near-exact (only the approx softmax reciprocal differs).
    out_f32 = jax.block_until_ready(visual_attention(
        images_embedded, h_lang_enc, w_img, w_lang, w_att, b_att,
        input_dtype=jnp.float32))
    np.testing.assert_allclose(np.asarray(out_f32), np.asarray(ref),
                               rtol=5e-3, atol=5e-3)

    # Default bf16 input path (halves HBM traffic on x): looser tolerance.
    out_bf16 = jax.block_until_ready(visual_attention(
        images_embedded, h_lang_enc, w_img, w_lang, w_att, b_att))
    np.testing.assert_allclose(np.asarray(out_bf16), np.asarray(ref),
                               rtol=4e-2, atol=4e-2)

    # Larger batch: exercises region padding + masking, batch padding and a
    # multi-step grid from the tile heuristic.
    B2 = 50
    kb1, kb2 = jax.random.split(jax.random.PRNGKey(1), 2)
    x2 = jax.random.normal(kb1, (B2, R, J), jnp.float32)
    h2 = jax.random.normal(kb2, (B2, L), jnp.float32)
    ref2 = visual_attention_ref(x2, h2, w_img, w_lang, w_att, b_att)
    out2 = jax.block_until_ready(visual_attention(x2, h2, w_img, w_lang, w_att, b_att))
    np.testing.assert_allclose(np.asarray(out2), np.asarray(ref2),
                               rtol=4e-2, atol=4e-2)

    print("KERNEL_OK")
</pallas_src>

<mosaic_0001>
module attributes {stable_mosaic.version = 11 : i64} {
  func.func @kernel(%arg0: i32, %arg1: memref<8x16x32xf32, #tpu.memory_space<vmem>>, %arg2: memref<8x16xf32, #tpu.memory_space<vmem>>, %arg3: memref<32x24xf32, #tpu.memory_space<vmem>>, %arg4: memref<16x24xf32, #tpu.memory_space<vmem>>, %arg5: memref<1x24xf32, #tpu.memory_space<vmem>>, %arg6: memref<8x32xf32, #tpu.memory_space<vmem>>) attributes {dimension_semantics = [#tpu.dimension_semantics<parallel>], iteration_bounds = array<i64: 1>, scalar_prefetch = 0 : i64, scratch_operands = 0 : i64, tpu.core_type = #tpu.core_type<tc>, window_params = [{transform_indices = @transform_0, window_bounds = array<i64: 8, 16, 32>}, {transform_indices = @transform_1, window_bounds = array<i64: 8, 16>}, {pipeline_mode = #tpu.pipeline_mode<synchronous>, transform_indices = @transform_2, window_bounds = array<i64: 32, 24>}, {pipeline_mode = #tpu.pipeline_mode<synchronous>, transform_indices = @transform_3, window_bounds = array<i64: 16, 24>}, {pipeline_mode = #tpu.pipeline_mode<synchronous>, transform_indices = @transform_4, window_bounds = array<i64: 1, 24>}, {transform_indices = @transform_5, window_bounds = array<i64: 8, 32>}]} {
    %c0 = arith.constant 0 : index
    %c0_0 = arith.constant 0 : index
    %c0_1 = arith.constant 0 : index
    %0 = vector.load %arg1[%c0, %c0_0, %c0_1] : memref<8x16x32xf32, #tpu.memory_space<vmem>>, vector<8x16x32xf32>
    %1 = vector.shape_cast %0 : vector<8x16x32xf32> to vector<128x32xf32>
    %c0_2 = arith.constant 0 : index
    %c0_3 = arith.constant 0 : index
    %2 = vector.load %arg3[%c0_2, %c0_3] : memref<32x24xf32, #tpu.memory_space<vmem>>, vector<32x24xf32>
    %cst = arith.constant dense<0.000000e+00> : vector<128x24xf32>
    %3 = tpu.matmul %1, %2, %cst {dimension_numbers = #tpu.dot_dimension_numbers<[1], [0], [0], [1], [0, 0, 1, 1], [], []>} : vector<128x32xf32>, vector<32x24xf32>, vector<128x24xf32> -> vector<128x24xf32>
    %c0_4 = arith.constant 0 : index
    %c0_5 = arith.constant 0 : index
    %4 = vector.load %arg2[%c0_4, %c0_5] : memref<8x16xf32, #tpu.memory_space<vmem>>, vector<8x16xf32>
    %c0_6 = arith.constant 0 : index
    %c0_7 = arith.constant 0 : index
    %5 = vector.load %arg4[%c0_6, %c0_7] : memref<16x24xf32, #tpu.memory_space<vmem>>, vector<16x24xf32>
    %cst_8 = arith.constant dense<0.000000e+00> : vector<8x24xf32>
    %6 = tpu.matmul %4, %5, %cst_8 {dimension_numbers = #tpu.dot_dimension_numbers<[1], [0], [0], [1], [0, 0, 1, 1], [], []>} : vector<8x16xf32>, vector<16x24xf32>, vector<8x24xf32> -> vector<8x24xf32>
    %7 = vector.shape_cast %3 : vector<128x24xf32> to vector<8x16x24xf32>
    %8 = vector.shape_cast %6 : vector<8x24xf32> to vector<8x1x24xf32>
    %9 = vector.broadcast %8 : vector<8x1x24xf32> to vector<8x16x24xf32>
    %10 = arith.addf %7, %9 : vector<8x16x24xf32>
    %11 = math.tanh %10 : vector<8x16x24xf32>
    %c0_9 = arith.constant 0 : index
    %c0_10 = arith.constant 0 : index
    %12 = vector.load %arg5[%c0_9, %c0_10] : memref<1x24xf32, #tpu.memory_space<vmem>>, vector<1x24xf32>
    %13 = vector.shape_cast %12 : vector<1x24xf32> to vector<1x1x24xf32>
    %14 = vector.broadcast %13 : vector<1x1x24xf32> to vector<8x16x24xf32>
    %15 = arith.mulf %11, %14 : vector<8x16x24xf32>
    %cst_11 = arith.constant dense<0.000000e+00> : vector<8x16xf32>
    %16 = vector.multi_reduction <add>, %15, %cst_11 [2] : vector<8x16x24xf32> to vector<8x16xf32>
    %17 = tpu.iota {dimensions = array<i32: 1>} : vector<8x16xi32>
    %c10_i32 = arith.constant 10 : i32
    %18 = vector.broadcast %c10_i32 : i32 to vector<8x16xi32>
    %19 = arith.cmpi slt, %17, %18 : vector<8x16xi32>
    %cst_12 = arith.constant -1.000000e+30 : f32
    %20 = vector.broadcast %cst_12 : f32 to vector<8x16xf32>
    %21 = arith.select %19, %16, %20 : vector<8x16xi1>, vector<8x16xf32>
    %cst_13 = arith.constant dense<0xFF800000> : vector<8xf32>
    %22 = vector.multi_reduction <maximumf>, %21, %cst_13 [1] : vector<8x16xf32> to vector<8xf32>
    %23 = vector.shape_cast %22 : vector<8xf32> to vector<8x1xf32>
    %24 = vector.broadcast %23 : vector<8x1xf32> to vector<8x16xf32>
    %25 = arith.subf %21, %24 : vector<8x16xf32>
    %26 = math.exp %25 : vector<8x16xf32>
    %cst_14 = arith.constant dense<0.000000e+00> : vector<8xf32>
    %27 = vector.multi_reduction <add>, %26, %cst_14 [1] : vector<8x16xf32> to vector<8xf32>
    %28 = vector.shape_cast %27 : vector<8xf32> to vector<8x1xf32>
    %29 = tpu.reciprocal %28 {approx = true} : vector<8x1xf32> -> vector<8x1xf32>
    %30 = vector.broadcast %29 : vector<8x1xf32> to vector<8x16xf32>
    %31 = arith.mulf %26, %30 : vector<8x16xf32>
    %32 = vector.shape_cast %31 : vector<8x16xf32> to vector<8x16x1xf32>
    %33 = vector.broadcast %32 : vector<8x16x1xf32> to vector<8x16x32xf32>
    %34 = arith.mulf %33, %0 : vector<8x16x32xf32>
    %cst_15 = arith.constant dense<0.000000e+00> : vector<8x32xf32>
    %35 = vector.multi_reduction <add>, %34, %cst_15 [1] : vector<8x16x32xf32> to vector<8x32xf32>
    %c0_16 = arith.constant 0 : index
    %c0_17 = arith.constant 0 : index
    %36 = vector.load %arg6[%c0_16, %c0_17] : memref<8x32xf32, #tpu.memory_space<vmem>>, vector<8x32xf32>
    tpu.vector_store %arg6[%c0_16, %c0_17], %35 {strides = array<i32>} : memref<8x32xf32, #tpu.memory_space<vmem>>, vector<8x32xf32>,
    return
  }
  func.func @transform_0(%arg0: i32) -> (i32, i32, i32) {
    %c0_i32 = arith.constant 0 : i32
    %c0_i32_0 = arith.constant 0 : i32
    %c0_i32_1 = arith.constant 0 : i32
    return %arg0, %c0_i32, %c0_i32_0 : i32, i32, i32
  }
  func.func @transform_1(%arg0: i32) -> (i32, i32) {
    %c0_i32 = arith.constant 0 : i32
    %c0_i32_0 = arith.constant 0 : i32
    return %arg0, %c0_i32 : i32, i32
  }
  func.func @transform_2(%arg0: i32) -> (i32, i32) {
    %c0_i32 = arith.constant 0 : i32
    %c0_i32_0 = arith.constant 0 : i32
    %c0_i32_1 = arith.constant 0 : i32
    return %c0_i32, %c0_i32_0 : i32, i32
  }
  func.func @transform_3(%arg0: i32) -> (i32, i32) {
    %c0_i32 = arith.constant 0 : i32
    %c0_i32_0 = arith.constant 0 : i32
    %c0_i32_1 = arith.constant 0 : i32
    return %c0_i32, %c0_i32_0 : i32, i32
  }
  func.func @transform_4(%arg0: i32) -> (i32, i32) {
    %c0_i32 = arith.constant 0 : i32
    %c0_i32_0 = arith.constant 0 : i32
    %c0_i32_1 = arith.constant 0 : i32
    return %c0_i32, %c0_i32_0 : i32, i32
  }
  func.func @transform_5(%arg0: i32) -> (i32, i32) {
    %c0_i32 = arith.constant 0 : i32
    %c0_i32_0 = arith.constant 0 : i32
    return %arg0, %c0_i32 : i32, i32
  }
}

</mosaic_0001>

<llo_original>
// kernel: tpu_custom_call.1
$region0: #{tpu_custom_call.1}
  #allocation0 [shape = 'u32[]', space=smem, size = 0x4, offset = 0x4, fixed_abs, tag = 'smem constant byte address 0x4 - core index']
  #allocation1 [shape = 'u32[72,128]{1,0:T(1,128)}', space=vmem, size = 0x9000, scoped, tag = 'internal scratch']
  %s0 = inlined_call_operand.hbm [shape: f32[8,16,32], index: 0, kind: input, shape index: {}]
  %s1 = inlined_call_operand.vmem [shape: f32[8,16], index: 1, kind: input, shape index: {}]
  %s2 = inlined_call_operand.vmem [shape: f32[32,24], index: 2, kind: input, shape index: {}]
  %s3 = inlined_call_operand.vmem [shape: f32[16,24], index: 3, kind: input, shape index: {}]
  %s4 = inlined_call_operand.vmem [shape: f32[1,24], index: 4, kind: input, shape index: {}]
  %s5 = inlined_call_operand.hbm [shape: f32[8,32], index: 5, kind: output, shape index: {}]
  %s6 = sld [smem:[#allocation0]]
  $region34: #{tpu_custom_call.1} parent=0
    _
  %s8 = ssub.s32 1, %s6
  %s9 = scalar_select 0, %s8, %s6
  $region1: #{tpu_custom_call.1} parent=0
    #allocation2 [shape = 'u8[65536]{0}', space=vmem, size = 0x10000, scoped, tag = 'input window, operand 0, single buffered']
    #allocation3 [shape = 's32[1]{0}', space=sflag, size = 0x4, scoped, tag = 'scoped memory for tpu_custom_call.1']
    #allocation4 [shape = 's32[1]{0}', space=sflag, size = 0x4, scoped, tag = 'scoped memory for tpu_custom_call.1']
    #allocation5 [shape = 'u8[4096]{0}', space=vmem, size = 0x1000, scoped, tag = 'output window, operand 0, single buffered']
    %10 = vsyncpa [#allocation3], 0
    %11 = vsyncpa [#allocation4], 0
    // Predicated region
    $region2: #{tpu_custom_call.1} parent=1 // pred_check
      _
    $region3: #{tpu_custom_call.1} parent=1 // pred_check_branch
      %13 = sbr.rel (0) target = $region5
    $region4: #{tpu_custom_call.1} parent=1 // pred_region
      %15 = vsyncadd [#allocation3], 0
      %s16 = sshll.u32 %s0, 4
      %s17 = int_to_ptr.hbm [resolvable:$true] %s16
      %s18 = sshll.u32 [#allocation2], 4
      %s19 = int_to_ptr.vmem [resolvable:$true] %s18
      %24 = dma.hbm_to_vmem [thread:$0]  %s17, 2048, %s19, [#allocation3], 128, 128, 8
    $region5: #{tpu_custom_call.1} parent=1 // pred_fallthru
      _
    // Predicated region
    $region6: #{tpu_custom_call.1} parent=1 // pred_check
      _
    $region7: #{tpu_custom_call.1} parent=1 // pred_check_branch
      %26 = sbr.rel (0) target = $region9
    $region8: #{tpu_custom_call.1} parent=1 // pred_region
      _
    $region9: #{tpu_custom_call.1} parent=1 // pred_fallthru
      _
    // Predicated region
    $region10: #{tpu_custom_call.1} parent=1 // pred_check
      _
    $region11: #{tpu_custom_call.1} parent=1 // pred_check_branch
      %28 = sbr.rel (0) target = $region13
    $region12: #{tpu_custom_call.1} parent=1 // pred_region
      _
    $region13: #{tpu_custom_call.1} parent=1 // pred_fallthru
      _
    // Predicated region
    $region14: #{tpu_custom_call.1} parent=1 // pred_check
      _
    $region15: #{tpu_custom_call.1} parent=1 // pred_check_branch
      %30 = sbr.rel (0) target = $region17
    $region16: #{tpu_custom_call.1} parent=1 // pred_region
      _
    $region17: #{tpu_custom_call.1} parent=1 // pred_fallthru
      _
    // Predicated region
    $region18: #{tpu_custom_call.1} parent=1 // pred_check
      _
    $region19: #{tpu_custom_call.1} parent=1 // pred_check_branch
      %32 = sbr.rel (0) target = $region21
    $region20: #{tpu_custom_call.1} parent=1 // pred_region
      _
    $region21: #{tpu_custom_call.1} parent=1 // pred_fallthru
      _
    // Predicated region
    $region22: #{tpu_custom_call.1} parent=1 // pred_check
      _
    $region23: #{tpu_custom_call.1} parent=1 // pred_check_branch
      %34 = sbr.rel (0) target = $region25
    $region24: #{tpu_custom_call.1} parent=1 // pred_region
      %36 = dma.done [#allocation3], 2048
    $region25: #{tpu_custom_call.1} parent=1 // pred_fallthru
      _
    %v37 = vld [vmem:[#allocation2] sm:$0xff]
    %v38 = vld [vmem:[#allocation2 + $0x8] sm:$0xff]
    %v39 = vld [vmem:[#allocation2 + $0x10] sm:$0xff]
    %v40 = vld [vmem:[#allocation2 + $0x18] sm:$0xff]
    %v41 = vld [vmem:[#allocation2 + $0x20] sm:$0xff]
    %v42 = vld [vmem:[#allocation2 + $0x28] sm:$0xff]
    %v43 = vld [vmem:[#allocation2 + $0x30] sm:$0xff]
    %v44 = vld [vmem:[#allocation2 + $0x38] sm:$0xff]
    %v45 = vld [vmem:[#allocation2 + $0x40] sm:$0xff]
    %v46 = vld [vmem:[#allocation2 + $0x48] sm:$0xff]
    %v47 = vld [vmem:[#allocation2 + $0x50] sm:$0xff]
    %v48 = vld [vmem:[#allocation2 + $0x58] sm:$0xff]
    %v49 = vld [vmem:[#allocation2 + $0x60] sm:$0xff]
    %v50 = vld [vmem:[#allocation2 + $0x68] sm:$0xff]
    %v51 = vld [vmem:[#allocation2 + $0x70] sm:$0xff]
    %v52 = vld [vmem:[#allocation2 + $0x78] sm:$0xff]
    %v53 = vld [vmem:[%s2] sm:$0xff]
    %v54 = vld [vmem:[%s2 + $0x8] sm:$0xff]
    %v55 = vld [vmem:[%s2 + $0x10] sm:$0xff]
    %v56 = vld [vmem:[%s2 + $0x18] sm:$0xff]
    %vm57 = vcmask 261120
    %v59 = vsel %vm57, %v37, 0
    %v62 = vsel %vm57, %v38, 0
    %v65 = vsel %vm57, %v39, 0
    %v68 = vsel %vm57, %v40, 0
    %v71 = vsel %vm57, %v41, 0
    %v74 = vsel %vm57, %v42, 0
    %v77 = vsel %vm57, %v43, 0
    %v80 = vsel %vm57, %v44, 0
    %v83 = vsel %vm57, %v45, 0
    %v86 = vsel %vm57, %v46, 0
    %v89 = vsel %vm57, %v47, 0
    %v92 = vsel %vm57, %v48, 0
    %v95 = vsel %vm57, %v49, 0
    %v98 = vsel %vm57, %v50, 0
    %v101 = vsel %vm57, %v51, 0
    %v104 = vsel %vm57, %v52, 0
    %106 = vmatpush.msra.mxu0 0.0
    %107 = vmatpush.msra.mxu0 0.0
    %108 = vmatpush.msra.mxu0 0.0
    %109 = vmatpush.msra.mxu0 0.0
    %110 = vmatpush.msra.mxu0 0.0
    %111 = vmatpush.msra.mxu0 0.0
    %112 = vmatpush.msra.mxu0 0.0
    %113 = vmatpush.msra.mxu0 0.0
    %114 = vmatpush.msra.mxu0 0.0
    %115 = vmatpush.msra.mxu0 0.0
    %116 = vmatpush.msra.mxu0 0.0
    %117 = vmatpush.msra.mxu0 0.0
    %118 = vmatpush.msra.mxu0 %v56
    %119 = vmatpush.msra.mxu0 %v55
    %120 = vmatpush.msra.mxu0 %v54
    %121 = vmatpush.msra.mxu0 %v53
    %122 = vmatmul.f32.gmra.mxu0 %v59
    %v123 = vpop.f32.mrf.mxu0
    %v124 = vadd.f32 0.0, %v123
    %125 = vmatmul.f32.gmra.mxu0 %v62
    %v126 = vpop.f32.mrf.mxu0
    %v127 = vadd.f32 0.0, %v126
    %128 = vmatmul.f32.gmra.mxu0 %v65
    %v129 = vpop.f32.mrf.mxu0
    %v130 = vadd.f32 0.0, %v129
    %131 = vmatmul.f32.gmra.mxu0 %v68
    %v132 = vpop.f32.mrf.mxu0
    %v133 = vadd.f32 0.0, %v132
    %134 = vmatmul.f32.gmra.mxu0 %v71
    %v135 = vpop.f32.mrf.mxu0
    %v136 = vadd.f32 0.0, %v135
    %137 = vmatmul.f32.gmra.mxu0 %v74
    %v138 = vpop.f32.mrf.mxu0
    %v139 = vadd.f32 0.0, %v138
    %140 = vmatmul.f32.gmra.mxu0 %v77
    %v141 = vpop.f32.mrf.mxu0
    %v142 = vadd.f32 0.0, %v141
    %143 = vmatmul.f32.gmra.mxu0 %v80
    %v144 = vpop.f32.mrf.mxu0
    %v145 = vadd.f32 0.0, %v144
    %146 = vmatmul.f32.gmra.mxu0 %v83
    %v147 = vpop.f32.mrf.mxu0
    %v148 = vadd.f32 0.0, %v147
    %149 = vmatmul.f32.gmra.mxu0 %v86
    %v150 = vpop.f32.mrf.mxu0
    %v151 = vadd.f32 0.0, %v150
    %152 = vmatmul.f32.gmra.mxu0 %v89
    %v153 = vpop.f32.mrf.mxu0
    %v154 = vadd.f32 0.0, %v153
    %155 = vmatmul.f32.gmra.mxu0 %v92
    %v156 = vpop.f32.mrf.mxu0
    %v157 = vadd.f32 0.0, %v156
    %158 = vmatmul.f32.gmra.mxu0 %v95
    %v159 = vpop.f32.mrf.mxu0
    %v160 = vadd.f32 0.0, %v159
    %161 = vmatmul.f32.gmra.mxu0 %v98
    %v162 = vpop.f32.mrf.mxu0
    %v163 = vadd.f32 0.0, %v162
    %164 = vmatmul.f32.gmra.mxu0 %v101
    %v165 = vpop.f32.mrf.mxu0
    %v166 = vadd.f32 0.0, %v165
    %167 = vmatmul.f32.gmra.mxu0 %v104
    %v168 = vpop.f32.mrf.mxu0
    %v169 = vadd.f32 0.0, %v168
    %170 = vdwg.mxu0
    %v171 = vld [vmem:[%s1] sm:$0xff]
    %v172 = vld [vmem:[%s3] sm:$0xff]
    %v173 = vld [vmem:[%s3 + $0x8] sm:$0xff]
    %vm174 = vcmask 130048
    %v176 = vsel %vm174, %v171, 0
    %178 = vmatpush.msra.mxu0 0.0
    %179 = vmatpush.msra.mxu0 0.0
    %180 = vmatpush.msra.mxu0 0.0
    %181 = vmatpush.msra.mxu0 0.0
    %182 = vmatpush.msra.mxu0 0.0
    %183 = vmatpush.msra.mxu0 0.0
    %184 = vmatpush.msra.mxu0 0.0
    %185 = vmatpush.msra.mxu0 0.0
    %186 = vmatpush.msra.mxu0 0.0
    %187 = vmatpush.msra.mxu0 0.0
    %188 = vmatpush.msra.mxu0 0.0
    %189 = vmatpush.msra.mxu0 0.0
    %190 = vmatpush.msra.mxu0 0.0
    %191 = vmatpush.msra.mxu0 0.0
    %192 = vmatpush.msra.mxu0 %v173
    %193 = vmatpush.msra.mxu0 %v172
    %194 = vmatmul.f32.gmra.mxu0 %v176
    %v195 = vpop.f32.mrf.mxu0
    %v196 = vadd.f32 0.0, %v195
    %197 = vdwg.mxu0
    %v199 = vrot.slane %v196, 1
    %v200 = vrot.slane %v196, 2
    %v201 = vrot.slane %v196, 3
    %v202 = vrot.slane %v196, 4
    %v203 = vrot.slane %v196, 5
    %v204 = vrot.slane %v196, 6
    %v205 = vrot.slane %v196, 7
    %v206 = vperm.slane %v196, 0
    %v207 = vperm.slane %v199, 0
    %v208 = vperm.slane %v200, 0
    %v209 = vperm.slane %v201, 0
    %v210 = vperm.slane %v202, 0
    %v211 = vperm.slane %v203, 0
    %v212 = vperm.slane %v204, 0
    %v213 = vperm.slane %v205, 0
    %v222 = vadd.f32 %v124, %v206
    %v223 = vadd.f32 %v127, %v206
    %v224 = vadd.f32 %v130, %v207
    %v225 = vadd.f32 %v133, %v207
    %v226 = vadd.f32 %v136, %v208
    %v227 = vadd.f32 %v139, %v208
    %v228 = vadd.f32 %v142, %v209
    %v229 = vadd.f32 %v145, %v209
    %v230 = vadd.f32 %v148, %v210
    %v231 = vadd.f32 %v151, %v210
    %v232 = vadd.f32 %v154, %v211
    %v233 = vadd.f32 %v157, %v211
    %v234 = vadd.f32 %v160, %v212
    %v235 = vadd.f32 %v163, %v212
    %v236 = vadd.f32 %v166, %v213
    %v237 = vadd.f32 %v169, %v213
    %v238 = vtanh.pop %v222
    %v239 = vtanh.pop %v223
    %v240 = vtanh.pop %v224
    %v241 = vtanh.pop %v225
    %v242 = vtanh.pop %v226
    %v243 = vtanh.pop %v227
    %v244 = vtanh.pop %v228
    %v245 = vtanh.pop %v229
    %v246 = vtanh.pop %v230
    %v247 = vtanh.pop %v231
    %v248 = vtanh.pop %v232
    %v249 = vtanh.pop %v233
    %v250 = vtanh.pop %v234
    %v251 = vtanh.pop %v235
    %v252 = vtanh.pop %v236
    %v253 = vtanh.pop %v237
    %v254 = vld [vmem:[%s4] sm:$0x1]
    %v256 = vperm.slane %v254, 0
    %v258 = vmul.f32 %v238, %v256
    %v259 = vmul.f32 %v239, %v256
    %v260 = vmul.f32 %v240, %v256
    %v261 = vmul.f32 %v241, %v256
    %v262 = vmul.f32 %v242, %v256
    %v263 = vmul.f32 %v243, %v256
    %v264 = vmul.f32 %v244, %v256
    %v265 = vmul.f32 %v245, %v256
    %v266 = vmul.f32 %v246, %v256
    %v267 = vmul.f32 %v247, %v256
    %v268 = vmul.f32 %v248, %v256
    %v269 = vmul.f32 %v249, %v256
    %v270 = vmul.f32 %v250, %v256
    %v271 = vmul.f32 %v251, %v256
    %v272 = vmul.f32 %v252, %v256
    %v273 = vmul.f32 %v253, %v256
    %vm274 = vcmask 195584
    %v275 = vsel %vm274, %v258, 0.0
    %276 = vadd.xlane.f32.xlu0 %v275
    %v277 = vpop.xlane.xlu0 %276
    %v278 = vsel %vm274, %v259, 0.0
    %279 = vadd.xlane.f32.xlu0 %v278
    %v280 = vpop.xlane.xlu0 %279
    %v281 = vsel %vm274, %v260, 0.0
    %282 = vadd.xlane.f32.xlu0 %v281
    %v283 = vpop.xlane.xlu0 %282
    %v284 = vsel %vm274, %v261, 0.0
    %285 = vadd.xlane.f32.xlu0 %v284
    %v286 = vpop.xlane.xlu0 %285
    %v287 = vsel %vm274, %v262, 0.0
    %288 = vadd.xlane.f32.xlu0 %v287
    %v289 = vpop.xlane.xlu0 %288
    %v290 = vsel %vm274, %v263, 0.0
    %291 = vadd.xlane.f32.xlu0 %v290
    %v292 = vpop.xlane.xlu0 %291
    %v293 = vsel %vm274, %v264, 0.0
    %294 = vadd.xlane.f32.xlu0 %v293
    %v295 = vpop.xlane.xlu0 %294
    %v296 = vsel %vm274, %v265, 0.0
    %297 = vadd.xlane.f32.xlu0 %v296
    %v298 = vpop.xlane.xlu0 %297
    %v299 = vsel %vm274, %v266, 0.0
    %300 = vadd.xlane.f32.xlu0 %v299
    %v301 = vpop.xlane.xlu0 %300
    %v302 = vsel %vm274, %v267, 0.0
    %303 = vadd.xlane.f32.xlu0 %v302
    %v304 = vpop.xlane.xlu0 %303
    %v305 = vsel %vm274, %v268, 0.0
    %306 = vadd.xlane.f32.xlu0 %v305
    %v307 = vpop.xlane.xlu0 %306
    %v308 = vsel %vm274, %v269, 0.0
    %309 = vadd.xlane.f32.xlu0 %v308
    %v310 = vpop.xlane.xlu0 %309
    %v311 = vsel %vm274, %v270, 0.0
    %312 = vadd.xlane.f32.xlu0 %v311
    %v313 = vpop.xlane.xlu0 %312
    %v314 = vsel %vm274, %v271, 0.0
    %315 = vadd.xlane.f32.xlu0 %v314
    %v316 = vpop.xlane.xlu0 %315
    %v317 = vsel %vm274, %v272, 0.0
    %318 = vadd.xlane.f32.xlu0 %v317
    %v319 = vpop.xlane.xlu0 %318
    %v320 = vsel %vm274, %v273, 0.0
    %321 = vadd.xlane.f32.xlu0 %v320
    %v322 = vpop.xlane.xlu0 %321
    %v323 = vlaneseq
    %v324 = vand.u32 %v323, 127
    %vm325 = vcmp.lt.s32.totalorder %v324, 10
    %v342 = vperm.slane %v277, %v324
    %v343 = vadd.s32 %v324, 4294967288
    %v344 = vperm.slane %v280, %v343
    %vm345 = vcmask 130112
    %v346 = vsel %vm345, %v344, %v342
    %v347 = vperm.slane %v283, %v324
    %v348 = vperm.slane %v286, %v343
    %v349 = vsel %vm345, %v348, %v347
    %v350 = vperm.slane %v289, %v324
    %v351 = vperm.slane %v292, %v343
    %v352 = vsel %vm345, %v351, %v350
    %v353 = vperm.slane %v295, %v324
    %v354 = vperm.slane %v298, %v343
    %v355 = vsel %vm345, %v354, %v353
    %v356 = vperm.slane %v301, %v324
    %v357 = vperm.slane %v304, %v343
    %v358 = vsel %vm345, %v357, %v356
    %v359 = vperm.slane %v307, %v324
    %v360 = vperm.slane %v310, %v343
    %v361 = vsel %vm345, %v360, %v359
    %v362 = vperm.slane %v313, %v324
    %v363 = vperm.slane %v316, %v343
    %v364 = vsel %vm345, %v363, %v362
    %v365 = vperm.slane %v319, %v324
    %v366 = vperm.slane %v322, %v343
    %v367 = vsel %vm345, %v366, %v365
    %vm368 = vcmask 1041409
    %v369 = vsel %vm368, %v349, %v346
    %vm370 = vcmask 1042434
    %v371 = vsel %vm370, %v352, %v369
    %vm372 = vcmask 1043459
    %v373 = vsel %vm372, %v355, %v371
    %vm374 = vcmask 1044484
    %v375 = vsel %vm374, %v358, %v373
    %vm376 = vcmask 1045509
    %v377 = vsel %vm376, %v361, %v375
    %vm378 = vcmask 1046534
    %v379 = vsel %vm378, %v364, %v377
    %vm380 = vcmask 1047559
    %v381 = vsel %vm380, %v367, %v379
    %v383 = vsel %vm325, %v381, -1e+30
    %v384 = vsel %vm174, %v383, -inf
    %385 = vmax.xlane.f32.xlu0 %v384
    %v386 = vpop.xlane.xlu0 %385
    %v387 = vsub.f32 %v383, %v386
    %v388 = vmul.f32 %v387, 1.442695
    %v389 = vpow.pop %v388
    %v390 = vsel %vm174, %v389, 0.0
    %391 = vadd.xlane.f32.xlu0 %v390
    %v392 = vpop.xlane.xlu0 %391
    %v393 = vrcp.pop %v392
    %v394 = vmul.f32 %v389, %v393
    %v395 = vperm.slane %v394, 0
    %v396 = vlaneseq
    %v397 = vshrl.u32 %v396, 7
    %399 = vset.pattern.permute.xlu0 %v397
    %400 = vperm.xlu0 %399, %v395
    %v401 = vpop.permute.xlu0 %400
    %v402 = vlaneseq
    %v403 = vshrl.u32 %v402, 7
    %v404 = vadd.s32 %v403, 8
    %405 = vset.pattern.permute.xlu0 %v404
    %406 = vperm.xlu0 %405, %v395
    %v407 = vpop.permute.xlu0 %406
    %v408 = vperm.slane %v394, 1
    %v409 = vlaneseq
    %v410 = vshrl.u32 %v409, 7
    %412 = vset.pattern.permute.xlu0 %v410
    %413 = vperm.xlu0 %412, %v408
    %v414 = vpop.permute.xlu0 %413
    %v415 = vlaneseq
    %v416 = vshrl.u32 %v415, 7
    %v417 = vadd.s32 %v416, 8
    %418 = vset.pattern.permute.xlu0 %v417
    %419 = vperm.xlu0 %418, %v408
    %v420 = vpop.permute.xlu0 %419
    %v421 = vperm.slane %v394, 2
    %v422 = vlaneseq
    %v423 = vshrl.u32 %v422, 7
    %425 = vset.pattern.permute.xlu0 %v423
    %426 = vperm.xlu0 %425, %v421
    %v427 = vpop.permute.xlu0 %426
    %v428 = vlaneseq
    %v429 = vshrl.u32 %v428, 7
    %v430 = vadd.s32 %v429, 8
    %431 = vset.pattern.permute.xlu0 %v430
    %432 = vperm.xlu0 %431, %v421
    %v433 = vpop.permute.xlu0 %432
    %v434 = vperm.slane %v394, 3
    %v435 = vlaneseq
    %v436 = vshrl.u32 %v435, 7
    %438 = vset.pattern.permute.xlu0 %v436
    %439 = vperm.xlu0 %438, %v434
    %v440 = vpop.permute.xlu0 %439
    %v441 = vlaneseq
    %v442 = vshrl.u32 %v441, 7
    %v443 = vadd.s32 %v442, 8
    %444 = vset.pattern.permute.xlu0 %v443
    %445 = vperm.xlu0 %444, %v434
    %v446 = vpop.permute.xlu0 %445
    %v447 = vperm.slane %v394, 4
    %v448 = vlaneseq
    %v449 = vshrl.u32 %v448, 7
    %451 = vset.pattern.permute.xlu0 %v449
    %452 = vperm.xlu0 %451, %v447
    %v453 = vpop.permute.xlu0 %452
    %v454 = vlaneseq
    %v455 = vshrl.u32 %v454, 7
    %v456 = vadd.s32 %v455, 8
    %457 = vset.pattern.permute.xlu0 %v456
    %458 = vperm.xlu0 %457, %v447
    %v459 = vpop.permute.xlu0 %458
    %v460 = vperm.slane %v394, 5
    %v461 = vlaneseq
    %v462 = vshrl.u32 %v461, 7
    %464 = vset.pattern.permute.xlu0 %v462
    %465 = vperm.xlu0 %464, %v460
    %v466 = vpop.permute.xlu0 %465
    %v467 = vlaneseq
    %v468 = vshrl.u32 %v467, 7
    %v469 = vadd.s32 %v468, 8
    %470 = vset.pattern.permute.xlu0 %v469
    %471 = vperm.xlu0 %470, %v460
    %v472 = vpop.permute.xlu0 %471
    %v473 = vperm.slane %v394, 6
    %v474 = vlaneseq
    %v475 = vshrl.u32 %v474, 7
    %477 = vset.pattern.permute.xlu0 %v475
    %478 = vperm.xlu0 %477, %v473
    %v479 = vpop.permute.xlu0 %478
    %v480 = vlaneseq
    %v481 = vshrl.u32 %v480, 7
    %v482 = vadd.s32 %v481, 8
    %483 = vset.pattern.permute.xlu0 %v482
    %484 = vperm.xlu0 %483, %v473
    %v485 = vpop.permute.xlu0 %484
    %v486 = vperm.slane %v394, 7
    %v487 = vlaneseq
    %v488 = vshrl.u32 %v487, 7
    %490 = vset.pattern.permute.xlu0 %v488
    %491 = vperm.xlu0 %490, %v486
    %v492 = vpop.permute.xlu0 %491
    %v493 = vlaneseq
    %v494 = vshrl.u32 %v493, 7
    %v495 = vadd.s32 %v494, 8
    %496 = vset.pattern.permute.xlu0 %v495
    %497 = vperm.xlu0 %496, %v486
    %v498 = vpop.permute.xlu0 %497
    %v499 = vmul.f32 %v401, %v37
    %v500 = vmul.f32 %v407, %v38
    %v501 = vmul.f32 %v414, %v39
    %v502 = vmul.f32 %v420, %v40
    %v503 = vmul.f32 %v427, %v41
    %v504 = vmul.f32 %v433, %v42
    %v505 = vmul.f32 %v440, %v43
    %v506 = vmul.f32 %v446, %v44
    %v507 = vmul.f32 %v453, %v45
    %v508 = vmul.f32 %v459, %v46
    %v509 = vmul.f32 %v466, %v47
    %v510 = vmul.f32 %v472, %v48
    %v511 = vmul.f32 %v479, %v49
    %v512 = vmul.f32 %v485, %v50
    %v513 = vmul.f32 %v492, %v51
    %v514 = vmul.f32 %v498, %v52
    %v515 = vsel %vm57, %v499, 0.0
    %v516 = vsel %vm57, %v500, 0.0
    %v517 = vadd.f32 %v515, %v516
    %v518 = vrot.slane %v517, 4
    %v519 = vadd.f32 %v517, %v518
    %v520 = vrot.slane %v519, 2
    %v521 = vadd.f32 %v519, %v520
    %v522 = vrot.slane %v521, 1
    %v523 = vadd.f32 %v521, %v522
    %v524 = vsel %vm57, %v501, 0.0
    %v525 = vsel %vm57, %v502, 0.0
    %v526 = vadd.f32 %v524, %v525
    %v527 = vrot.slane %v526, 4
    %v528 = vadd.f32 %v526, %v527
    %v529 = vrot.slane %v528, 2
    %v530 = vadd.f32 %v528, %v529
    %v531 = vrot.slane %v530, 1
    %v532 = vadd.f32 %v530, %v531
    %v533 = vsel %vm57, %v503, 0.0
    %v534 = vsel %vm57, %v504, 0.0
    %v535 = vadd.f32 %v533, %v534
    %v536 = vrot.slane %v535, 4
    %v537 = vadd.f32 %v535, %v536
    %v538 = vrot.slane %v537, 2
    %v539 = vadd.f32 %v537, %v538
    %v540 = vrot.slane %v539, 1
    %v541 = vadd.f32 %v539, %v540
    %v542 = vsel %vm57, %v505, 0.0
    %v543 = vsel %vm57, %v506, 0.0
    %v544 = vadd.f32 %v542, %v543
    %v545 = vrot.slane %v544, 4
    %v546 = vadd.f32 %v544, %v545
    %v547 = vrot.slane %v546, 2
    %v548 = vadd.f32 %v546, %v547
    %v549 = vrot.slane %v548, 1
    %v550 = vadd.f32 %v548, %v549
    %v551 = vsel %vm57, %v507, 0.0
    %v552 = vsel %vm57, %v508, 0.0
    %v553 = vadd.f32 %v551, %v552
    %v554 = vrot.slane %v553, 4
    %v555 = vadd.f32 %v553, %v554
    %v556 = vrot.slane %v555, 2
    %v557 = vadd.f32 %v555, %v556
    %v558 = vrot.slane %v557, 1
    %v559 = vadd.f32 %v557, %v558
    %v560 = vsel %vm57, %v509, 0.0
    %v561 = vsel %vm57, %v510, 0.0
    %v562 = vadd.f32 %v560, %v561
    %v563 = vrot.slane %v562, 4
    %v564 = vadd.f32 %v562, %v563
    %v565 = vrot.slane %v564, 2
    %v566 = vadd.f32 %v564, %v565
    %v567 = vrot.slane %v566, 1
    %v568 = vadd.f32 %v566, %v567
    %v569 = vsel %vm57, %v511, 0.0
    %v570 = vsel %vm57, %v512, 0.0
    %v571 = vadd.f32 %v569, %v570
    %v572 = vrot.slane %v571, 4
    %v573 = vadd.f32 %v571, %v572
    %v574 = vrot.slane %v573, 2
    %v575 = vadd.f32 %v573, %v574
    %v576 = vrot.slane %v575, 1
    %v577 = vadd.f32 %v575, %v576
    %v578 = vsel %vm57, %v513, 0.0
    %v579 = vsel %vm57, %v514, 0.0
    %v580 = vadd.f32 %v578, %v579
    %v581 = vrot.slane %v580, 4
    %v582 = vadd.f32 %v580, %v581
    %v583 = vrot.slane %v582, 2
    %v584 = vadd.f32 %v582, %v583
    %v585 = vrot.slane %v584, 1
    %v586 = vadd.f32 %v584, %v585
    %v595 = vsel %vm368, %v532, %v523
    %v596 = vsel %vm370, %v541, %v595
    %v597 = vsel %vm372, %v550, %v596
    %v598 = vsel %vm374, %v559, %v597
    %v599 = vsel %vm376, %v568, %v598
    %v600 = vsel %vm378, %v577, %v599
    %v601 = vsel %vm380, %v586, %v600
    %603 = vst.msk [vmem:[#allocation5] sm:$0xff] %vm57, %v601
    // Predicated region
    $region26: #{tpu_custom_call.1} parent=1 // pred_check
      _
    $region27: #{tpu_custom_call.1} parent=1 // pred_check_branch
      %605 = sbr.rel (0) target = $region29
    $region28: #{tpu_custom_call.1} parent=1 // pred_region
      %607 = vsyncadd [#allocation4], 0
      %s609 = sshll.u32 [#allocation5], 4
      %s610 = int_to_ptr.vmem [resolvable:$true] %s609
      %s611 = sshll.u32 %s5, 4
      %s612 = int_to_ptr.hbm [resolvable:$true] %s611
      %614 = dma.vmem_to_hbm [thread:$0]  %s610, 128, %s612, [#allocation4]
    $region29: #{tpu_custom_call.1} parent=1 // pred_fallthru
      _
    // Predicated region
    $region30: #{tpu_custom_call.1} parent=1 // pred_check
      _
    $region31: #{tpu_custom_call.1} parent=1 // pred_check_branch
      %616 = sbr.rel (0) target = $region33
    $region32: #{tpu_custom_call.1} parent=1 // pred_region
      %618 = dma.done [#allocation4], 128
    $region33: #{tpu_custom_call.1} parent=1 // pred_fallthru
      _
    %619 = vsyncpa [#allocation3], 1
    %620 = vsyncpa [#allocation4], 1

</llo_original>
